<compile_context>
chip_gen: v7x
topology: tpu7x:2x2x1
jax: 0.10.0
libtpu: 0.0.40
codegen_flags: <defaults>
</compile_context>

<pallas_src>
import functools

import jax
import jax.numpy as jnp
from jax import lax
from jax.experimental import pallas as pl
from jax.experimental.pallas import tpu as pltpu


def _round_up(x, m):
    return ((x + m - 1) // m) * m


def _choose_out_tile(n, target):
    """Pick the square output tile: multiple of 256 (MXU width on v6e/v7x),
    128 only for tiny inputs.  Minimize padding waste first, then prefer the
    largest tile among near-minimal-padding candidates; avoid a 1-block grid.
    """
    n128 = _round_up(max(n, 1), 128)
    if n128 <= 256:
        return n128
    cap = min(target, n128)
    cands = list(range(256, cap + 1, 256)) or [256]
    best_pad = min(_round_up(n, t) for t in cands)
    ok = [t for t in cands if _round_up(n, t) <= int(best_pad * 1.0625) + 128]
    t = max(ok)
    # Keep >= 2 row/col blocks so the symmetry trick saves work and the
    # "parallel" pair axis can be split across TensorCores (v7x megacore).
    if _round_up(n, t) // t == 1 and t > 256:
        t = _round_up(t // 2, 128)
    return t


def _choose_k_tile(d, target):
    """Contraction tile: largest multiple of 128 <= target dividing padded D
    (so no extra feature padding beyond the 128-lane minimum)."""
    d_pad = _round_up(max(d, 1), 128)
    tk = 128
    for t in range(128, min(target, d_pad) + 1, 128):
        if d_pad % t == 0:
            tk = t
    return tk, d_pad


def _poli_block_direct(bi_ref, bj_ref, xr_ref, xc_ref, o_ref, *,
                       constant_term, degree):
    """float32 output: accumulate straight into the resident output block."""
    k = pl.program_id(1)

    @pl.when(k == 0)
    def _():
        o_ref[...] = jnp.zeros_like(o_ref)

    # X_rows_tile @ X_cols_tile.T  (contract the feature axis of both) -> MXU
    o_ref[...] += lax.dot_general(
        xr_ref[...],
        xc_ref[...],
        dimension_numbers=(((1,), (1,)), ((), ())),
        preferred_element_type=jnp.float32,
    )

    @pl.when(k == pl.num_programs(1) - 1)
    def _():
        # degree is a static Python int -> integer_pow (VPU), not exp*log (EUP)
        o_ref[...] = (o_ref[...] + constant_term) ** degree


def _poli_block_acc(bi_ref, bj_ref, xr_ref, xc_ref, o_ref, acc_ref, *,
                    constant_term, degree):
    """Generic output dtype: f32 VMEM accumulator, cast on the last k step."""
    k = pl.program_id(1)

    @pl.when(k == 0)
    def _():
        acc_ref[...] = jnp.zeros_like(acc_ref)

    acc_ref[...] += lax.dot_general(
        xr_ref[...],
        xc_ref[...],
        dimension_numbers=(((1,), (1,)), ((), ())),
        preferred_element_type=jnp.float32,
    )

    @pl.when(k == pl.num_programs(1) - 1)
    def _():
        o_ref[...] = ((acc_ref[...] + constant_term) ** degree).astype(o_ref.dtype)


def poli_kernel(x, *, constant_term=1, degree=2, out_tile=None, k_tile=None,
                compute_dtype=None):
    """K = (x @ x.T + constant_term) ** degree, computed on-TPU via Pallas."""
    n, d = x.shape
    out_dtype = x.dtype

    constant_term = float(constant_term)
    degree = int(degree)

    # Optional bf16 MXU feed (halves input DMA, ~2-4x MXU rate); numerics
    # change slightly, so this is opt-in.  Accumulation stays f32.
    if compute_dtype is not None and x.dtype != jnp.dtype(compute_dtype):
        x = x.astype(compute_dtype)

    # --- per-core VMEM budget ------------------------------------------------
    try:
        vmem_cap = int(pltpu.get_tpu_info().vmem_capacity_bytes)
        if vmem_cap <= 0:
            raise ValueError("bad vmem capacity")
    except Exception:
        vmem_cap = 64 * 1024 * 1024      # conservative: v7x per-TensorCore VMEM
    vmem_budget = int(vmem_cap * 0.75)   # headroom for compiler scratch / sems

    # --- tile selection -------------------------------------------------------
    t_target = out_tile if out_tile is not None else (
        2048 if vmem_cap >= (100 << 20) else 1024)   # v5e/v6e vs v7x
    tk_target = k_tile if k_tile is not None else 512

    t_nm = _choose_out_tile(n, t_target)
    tk, d_pad = _choose_k_tile(d, tk_target)

    in_item = jnp.dtype(x.dtype).itemsize
    out_item = jnp.dtype(out_dtype).itemsize
    use_direct = out_dtype == jnp.float32

    def _vmem_bytes(t, tkk):
        b = 2 * 2 * t * tkk * in_item       # two input specs, double-buffered
        b += 2 * t * t * out_item           # double-buffered output tile
        if not use_direct:
            b += t * t * 4                  # f32 accumulator scratch
        return b

    while t_nm > 128 and _vmem_bytes(t_nm, tk) > vmem_budget:
        t_nm = _round_up(t_nm // 2, 128)

    n_pad = _round_up(n, t_nm)
    if (n_pad, d_pad) != (n, d):
        # Zero feature padding does not change X @ X.T; padded rows/cols give
        # constant_term**degree and are removed by the final [:n, :n] slice.
        x = jnp.pad(x, ((0, n_pad - n), (0, d_pad - d)))

    nb = n_pad // t_nm
    kt = d_pad // tk

    # Upper-triangular block pairs (bi <= bj) — scalar-prefetched index tables.
    pairs = [(i, j) for i in range(nb) for j in range(i, nb)]
    num_pairs = len(pairs)
    bi = jnp.asarray([p[0] for p in pairs], dtype=jnp.int32)
    bj = jnp.asarray([p[1] for p in pairs], dtype=jnp.int32)

    if use_direct:
        kernel = functools.partial(
            _poli_block_direct, constant_term=constant_term, degree=degree)
        scratch_shapes = []
    else:
        kernel = functools.partial(
            _poli_block_acc, constant_term=constant_term, degree=degree)
        scratch_shapes = [pltpu.VMEM((t_nm, t_nm), jnp.float32)]

    cost = pl.CostEstimate(
        flops=2 * num_pairs * t_nm * t_nm * d_pad + 3 * num_pairs * t_nm * t_nm,
        transcendentals=0,
        bytes_accessed=(num_pairs * kt * 2 * t_nm * tk * in_item
                        + num_pairs * t_nm * t_nm * out_item),
    )

    k_upper = pl.pallas_call(
        kernel,
        out_shape=jax.ShapeDtypeStruct((n_pad, n_pad), out_dtype),
        grid_spec=pltpu.PrefetchScalarGridSpec(
            num_scalar_prefetch=2,
            grid=(num_pairs, kt),
            in_specs=[
                # rows operand: block (bi[p], k); cols operand: block (bj[p], k)
                pl.BlockSpec((t_nm, tk), lambda p, k, bi, bj: (bi[p], k)),
                pl.BlockSpec((t_nm, tk), lambda p, k, bi, bj: (bj[p], k)),
            ],
            out_specs=pl.BlockSpec((t_nm, t_nm),
                                   lambda p, k, bi, bj: (bi[p], bj[p])),
            scratch_shapes=scratch_shapes,
        ),
        compiler_params=pltpu.CompilerParams(
            dimension_semantics=("parallel", "arbitrary"),
            vmem_limit_bytes=vmem_budget,
        ),
        cost_estimate=cost,
    )(bi, bj, x, x)

    # Mirror the upper-triangular blocks into the lower triangle (block level).
    if nb > 1:
        row_blk = jnp.arange(n_pad, dtype=jnp.int32) // t_nm
        upper_mask = row_blk[:, None] <= row_blk[None, :]
        k_full = jnp.where(upper_mask, k_upper, k_upper.T)
    else:
        k_full = k_upper

    if n_pad != n:
        k_full = k_full[:n, :n]
    return k_full


if __name__ == "__main__":
    key = jax.random.PRNGKey(0)

    # small (n_samples, n_features) consistent with the module's forward
    N, D = 64, 256
    x = jax.random.normal(key, (N, D), dtype=jnp.float32)

    k_out = poli_kernel(x, constant_term=1, degree=2)
    jax.block_until_ready(k_out)

    k_ref = (x @ x.T + 1.0) ** 2
    assert k_out.shape == (N, N)
    assert jnp.allclose(k_out, k_ref, rtol=1e-5, atol=1e-4), "mismatch vs reference"

    # exercise the multi-block symmetric/mirroring path (non-divisible shapes)
    N2, D2 = 300, 192
    x2 = jax.random.normal(jax.random.PRNGKey(1), (N2, D2), dtype=jnp.float32)
    k2 = poli_kernel(x2, constant_term=1, degree=2)
    jax.block_until_ready(k2)
    k2_ref = (x2 @ x2.T + 1.0) ** 2
    assert k2.shape == (N2, N2)
    assert jnp.allclose(k2, k2_ref, rtol=1e-5, atol=1e-4), "mismatch (multi-block)"

    print("KERNEL_OK")
</pallas_src>

<mosaic_0001>
module attributes {stable_mosaic.version = 11 : i64} {
  func.func @_poli_block_direct(%arg0: i32, %arg1: i32, %arg2: memref<1xi32, #tpu.memory_space<smem>>, %arg3: memref<1xi32, #tpu.memory_space<smem>>, %arg4: memref<128x256xf32, #tpu.memory_space<vmem>>, %arg5: memref<128x256xf32, #tpu.memory_space<vmem>>, %arg6: memref<128x128xf32, #tpu.memory_space<vmem>>) attributes {dimension_semantics = [#tpu.dimension_semantics<parallel>, #tpu.dimension_semantics<arbitrary>], iteration_bounds = array<i64: 1, 1>, scalar_prefetch = 2 : i64, scratch_operands = 0 : i64, tpu.core_type = #tpu.core_type<tc>, window_params = [{transform_indices = @transform_0, window_bounds = array<i64: 128, 256>}, {transform_indices = @transform_1, window_bounds = array<i64: 128, 256>}, {transform_indices = @transform_2, window_bounds = array<i64: 128, 128>}]} {
    %c0_i32 = arith.constant 0 : i32
    %0 = arith.cmpi eq, %arg1, %c0_i32 : i32
    %1 = arith.extui %0 : i1 to i32
    %c0_i32_0 = arith.constant 0 : i32
    %2 = arith.cmpi ne, %1, %c0_i32_0 : i32
    scf.if %2 {
      %cst_10 = arith.constant 0.000000e+00 : f32
      %12 = vector.broadcast %cst_10 : f32 to vector<128x128xf32>
      %c0_11 = arith.constant 0 : index
      %c0_12 = arith.constant 0 : index
      %13 = vector.load %arg6[%c0_11, %c0_12] : memref<128x128xf32, #tpu.memory_space<vmem>>, vector<128x128xf32>
      tpu.vector_store %arg6[%c0_11, %c0_12], %12 {strides = array<i32>} : memref<128x128xf32, #tpu.memory_space<vmem>>, vector<128x128xf32>,
    } else {
    }
    %c0 = arith.constant 0 : index
    %c0_1 = arith.constant 0 : index
    %3 = vector.load %arg6[%c0, %c0_1] : memref<128x128xf32, #tpu.memory_space<vmem>>, vector<128x128xf32>
    %c0_2 = arith.constant 0 : index
    %c0_3 = arith.constant 0 : index
    %4 = vector.load %arg4[%c0_2, %c0_3] : memref<128x256xf32, #tpu.memory_space<vmem>>, vector<128x256xf32>
    %c0_4 = arith.constant 0 : index
    %c0_5 = arith.constant 0 : index
    %5 = vector.load %arg5[%c0_4, %c0_5] : memref<128x256xf32, #tpu.memory_space<vmem>>, vector<128x256xf32>
    %cst = arith.constant dense<0.000000e+00> : vector<128x128xf32>
    %6 = tpu.matmul %4, %5, %cst {dimension_numbers = #tpu.dot_dimension_numbers<[1], [1], [0], [0], [0, 0, 1, 0], [], []>} : vector<128x256xf32>, vector<128x256xf32>, vector<128x128xf32> -> vector<128x128xf32>
    %7 = arith.addf %3, %6 : vector<128x128xf32>
    %c0_6 = arith.constant 0 : index
    %c0_7 = arith.constant 0 : index
    %8 = vector.load %arg6[%c0_6, %c0_7] : memref<128x128xf32, #tpu.memory_space<vmem>>, vector<128x128xf32>
    tpu.vector_store %arg6[%c0_6, %c0_7], %7 {strides = array<i32>} : memref<128x128xf32, #tpu.memory_space<vmem>>, vector<128x128xf32>,
    %c0_i32_8 = arith.constant 0 : i32
    %9 = arith.cmpi eq, %arg1, %c0_i32_8 : i32
    %10 = arith.extui %9 : i1 to i32
    %c0_i32_9 = arith.constant 0 : i32
    %11 = arith.cmpi ne, %10, %c0_i32_9 : i32
    scf.if %11 {
      %c0_10 = arith.constant 0 : index
      %c0_11 = arith.constant 0 : index
      %12 = vector.load %arg6[%c0_10, %c0_11] : memref<128x128xf32, #tpu.memory_space<vmem>>, vector<128x128xf32>
      %cst_12 = arith.constant 1.000000e+00 : f32
      %13 = vector.broadcast %cst_12 : f32 to vector<128x128xf32>
      %14 = arith.addf %12, %13 : vector<128x128xf32>
      %15 = arith.mulf %14, %14 : vector<128x128xf32>
      %c0_13 = arith.constant 0 : index
      %c0_14 = arith.constant 0 : index
      %16 = vector.load %arg6[%c0_13, %c0_14] : memref<128x128xf32, #tpu.memory_space<vmem>>, vector<128x128xf32>
      tpu.vector_store %arg6[%c0_13, %c0_14], %15 {strides = array<i32>} : memref<128x128xf32, #tpu.memory_space<vmem>>, vector<128x128xf32>,
    } else {
    }
    return
  }
  func.func @transform_0(%arg0: i32, %arg1: i32, %arg2: memref<1xi32, #tpu.memory_space<smem>>, %arg3: memref<1xi32, #tpu.memory_space<smem>>) -> (i32, i32) {
    %0 = arith.index_cast %arg0 : i32 to index
    %1 = memref.load %arg2[%0] : memref<1xi32, #tpu.memory_space<smem>>
    %c0_i32 = arith.constant 0 : i32
    return %1, %arg1 : i32, i32
  }
  func.func @transform_1(%arg0: i32, %arg1: i32, %arg2: memref<1xi32, #tpu.memory_space<smem>>, %arg3: memref<1xi32, #tpu.memory_space<smem>>) -> (i32, i32) {
    %0 = arith.index_cast %arg0 : i32 to index
    %1 = memref.load %arg3[%0] : memref<1xi32, #tpu.memory_space<smem>>
    %c0_i32 = arith.constant 0 : i32
    return %1, %arg1 : i32, i32
  }
  func.func @transform_2(%arg0: i32, %arg1: i32, %arg2: memref<1xi32, #tpu.memory_space<smem>>, %arg3: memref<1xi32, #tpu.memory_space<smem>>) -> (i32, i32) {
    %0 = arith.index_cast %arg0 : i32 to index
    %1 = memref.load %arg2[%0] : memref<1xi32, #tpu.memory_space<smem>>
    %2 = arith.index_cast %arg0 : i32 to index
    %3 = memref.load %arg3[%2] : memref<1xi32, #tpu.memory_space<smem>>
    %c0_i32 = arith.constant 0 : i32
    return %1, %3 : i32, i32
  }
}

</mosaic_0001>

<llo_original>
// kernel: tpu_custom_call.1
$region0: #{tpu_custom_call.1}
  #allocation0 [shape = 'u32[]', space=smem, size = 0x4, offset = 0x4, fixed_abs, tag = 'smem constant byte address 0x4 - core index']
  #allocation1 [shape = 'u32[144,128]{1,0:T(1,128)}', space=vmem, size = 0x12000, scoped, tag = 'internal scratch']
  #allocation2 [shape = 's32[1]{0}', space=sflag, size = 0x4, scoped, tag = 'scoped memory for tpu_custom_call.1']
  #allocation3 [shape = 's32[1]{0:T(128)S(6)}', space=smem, size = 0x200, scoped, tag = 'prefetched SMEM operand 0']
  #allocation4 [shape = 's32[1]{0:T(128)S(6)}', space=smem, size = 0x200, scoped, tag = 'prefetched SMEM operand 1']
  %s0 = inlined_call_operand.<no memory space> [shape: s32[1], index: 0, kind: input, shape index: {}]
  %s1 = inlined_call_operand.<no memory space> [shape: s32[1], index: 1, kind: input, shape index: {}]
  %s2 = inlined_call_operand.hbm [shape: f32[128,256], index: 2, kind: input, shape index: {}]
  %s3 = inlined_call_operand.hbm [shape: f32[128,256], index: 3, kind: input, shape index: {}]
  %s4 = inlined_call_operand.hbm [shape: f32[128,128], index: 4, kind: output, shape index: {}]
  %s5 = sld [smem:[#allocation0]]
  $region34: #{tpu_custom_call.1} parent=0
    _
  %s7 = ssub.s32 1, %s5
  %s8 = scalar_select 0, %s7, %s5
  %9 = sst [smem:[#allocation3]] %s0
  %10 = sst [smem:[#allocation4]] %s1
  $region1: #{tpu_custom_call.1} parent=0
    #allocation5 [shape = 'u8[131072]{0}', space=vmem, size = 0x20000, scoped, tag = 'input window, operand 2, single buffered']
    #allocation6 [shape = 's32[1]{0}', space=sflag, size = 0x4, scoped, tag = 'scoped memory for tpu_custom_call.1']
    #allocation7 [shape = 's32[1]{0}', space=sflag, size = 0x4, scoped, tag = 'scoped memory for tpu_custom_call.1']
    #allocation8 [shape = 'u8[131072]{0}', space=vmem, size = 0x20000, scoped, tag = 'input window, operand 3, single buffered']
    #allocation9 [shape = 's32[1]{0}', space=sflag, size = 0x4, scoped, tag = 'scoped memory for tpu_custom_call.1']
    #allocation10 [shape = 'u8[65536]{0}', space=vmem, size = 0x10000, scoped, tag = 'output window, operand 0, single buffered']
    %11 = vsyncpa [#allocation6], 0
    %12 = vsyncpa [#allocation9], 0
    %13 = vsyncpa [#allocation7], 0
    // Predicated region
    $region2: #{tpu_custom_call.1} parent=1 // pred_check
      _
    $region3: #{tpu_custom_call.1} parent=1 // pred_check_branch
      %15 = sbr.rel (0) target = $region5
    $region4: #{tpu_custom_call.1} parent=1 // pred_region
      %s16 = sld [smem:[#allocation3]]
      %s17 = smul.u32 16, %s16
      %s19 = ssub.s32 4096, 4096
      %20 = vsyncadd [#allocation6], %s19
      %s21 = smul.addr %s17, 2
      %s22 = smul.addr %s21, 128
      %s23 = scalar_lea.hbm %s2, %s22
      %s24 = sshll.u32 [#allocation5], 4
      %s25 = int_to_ptr.vmem [resolvable:$true] %s24
      %30 = dma.hbm_to_vmem [thread:$0]  %s23, 4096, %s25, [#allocation6], 256, 256, 16
    $region5: #{tpu_custom_call.1} parent=1 // pred_fallthru
      _
    // Predicated region
    $region6: #{tpu_custom_call.1} parent=1 // pred_check
      _
    $region7: #{tpu_custom_call.1} parent=1 // pred_check_branch
      %32 = sbr.rel (0) target = $region9
    $region8: #{tpu_custom_call.1} parent=1 // pred_region
      %s33 = sld [smem:[#allocation4]]
      %s34 = smul.u32 16, %s33
      %s36 = ssub.s32 4096, 4096
      %37 = vsyncadd [#allocation9], %s36
      %s38 = smul.addr %s34, 2
      %s39 = smul.addr %s38, 128
      %s40 = scalar_lea.hbm %s3, %s39
      %s41 = sshll.u32 [#allocation8], 4
      %s42 = int_to_ptr.vmem [resolvable:$true] %s41
      %47 = dma.hbm_to_vmem [thread:$0]  %s40, 4096, %s42, [#allocation9], 256, 256, 16
    $region9: #{tpu_custom_call.1} parent=1 // pred_fallthru
      _
    // Predicated region
    $region10: #{tpu_custom_call.1} parent=1 // pred_check
      _
    $region11: #{tpu_custom_call.1} parent=1 // pred_check_branch
      %49 = sbr.rel (0) target = $region13
    $region12: #{tpu_custom_call.1} parent=1 // pred_region
      %50 = dma.done [#allocation6], 4096
    $region13: #{tpu_custom_call.1} parent=1 // pred_fallthru
      _
    // Predicated region
    $region14: #{tpu_custom_call.1} parent=1 // pred_check
      _
    $region15: #{tpu_custom_call.1} parent=1 // pred_check_branch
      %52 = sbr.rel (0) target = $region17
    $region16: #{tpu_custom_call.1} parent=1 // pred_region
      %53 = dma.done [#allocation9], 4096
    $region17: #{tpu_custom_call.1} parent=1 // pred_fallthru
      _
    %s54 = sld [smem:[#allocation3]]
    %s55 = smul.u32 16, %s54
    %s56 = sld [smem:[#allocation4]]
    %s57 = smul.u32 16, %s56
    %s58 = sld [smem:[#allocation3]]
    %s59 = sld [smem:[#allocation4]]
    %s60 = smul.u32 16, %s58
    %p61 = scmp.eq.s32.totalorder 0, 0
    // Predicated region
    $region18: #{tpu_custom_call.1} parent=1 // pred_check
      %p62 = pneg %p61
    $region19: #{tpu_custom_call.1} parent=1 // pred_check_branch
      %64 = sbr.rel (%p62) target = $region21
    $region20: #{tpu_custom_call.1} parent=1 // pred_region
      %65 = vst [vmem:[#allocation10] sm:$0xff] 0.0
      %66 = vst [vmem:[#allocation10 + $0x8] sm:$0xff] 0.0
      %67 = vst [vmem:[#allocation10 + $0x10] sm:$0xff] 0.0
      %68 = vst [vmem:[#allocation10 + $0x18] sm:$0xff] 0.0
      %69 = vst [vmem:[#allocation10 + $0x20] sm:$0xff] 0.0
      %70 = vst [vmem:[#allocation10 + $0x28] sm:$0xff] 0.0
      %71 = vst [vmem:[#allocation10 + $0x30] sm:$0xff] 0.0
      %72 = vst [vmem:[#allocation10 + $0x38] sm:$0xff] 0.0
      %73 = vst [vmem:[#allocation10 + $0x40] sm:$0xff] 0.0
      %74 = vst [vmem:[#allocation10 + $0x48] sm:$0xff] 0.0
      %75 = vst [vmem:[#allocation10 + $0x50] sm:$0xff] 0.0
      %76 = vst [vmem:[#allocation10 + $0x58] sm:$0xff] 0.0
      %77 = vst [vmem:[#allocation10 + $0x60] sm:$0xff] 0.0
      %78 = vst [vmem:[#allocation10 + $0x68] sm:$0xff] 0.0
      %79 = vst [vmem:[#allocation10 + $0x70] sm:$0xff] 0.0
      %80 = vst [vmem:[#allocation10 + $0x78] sm:$0xff] 0.0
    $region21: #{tpu_custom_call.1} parent=1 // pred_fallthru
      _
    %v81 = vld [vmem:[#allocation10] sm:$0xff]
    %v82 = vld [vmem:[#allocation10 + $0x8] sm:$0xff]
    %v83 = vld [vmem:[#allocation10 + $0x10] sm:$0xff]
    %v84 = vld [vmem:[#allocation10 + $0x18] sm:$0xff]
    %v85 = vld [vmem:[#allocation10 + $0x20] sm:$0xff]
    %v86 = vld [vmem:[#allocation10 + $0x28] sm:$0xff]
    %v87 = vld [vmem:[#allocation10 + $0x30] sm:$0xff]
    %v88 = vld [vmem:[#allocation10 + $0x38] sm:$0xff]
    %v89 = vld [vmem:[#allocation10 + $0x40] sm:$0xff]
    %v90 = vld [vmem:[#allocation10 + $0x48] sm:$0xff]
    %v91 = vld [vmem:[#allocation10 + $0x50] sm:$0xff]
    %v92 = vld [vmem:[#allocation10 + $0x58] sm:$0xff]
    %v93 = vld [vmem:[#allocation10 + $0x60] sm:$0xff]
    %v94 = vld [vmem:[#allocation10 + $0x68] sm:$0xff]
    %v95 = vld [vmem:[#allocation10 + $0x70] sm:$0xff]
    %v96 = vld [vmem:[#allocation10 + $0x78] sm:$0xff]
    %v97 = vld [vmem:[#allocation5] sm:$0xff]
    %v98 = vld [vmem:[#allocation5 + $0x8] sm:$0xff]
    %v99 = vld [vmem:[#allocation5 + $0x10] sm:$0xff]
    %v100 = vld [vmem:[#allocation5 + $0x18] sm:$0xff]
    %v101 = vld [vmem:[#allocation5 + $0x20] sm:$0xff]
    %v102 = vld [vmem:[#allocation5 + $0x28] sm:$0xff]
    %v103 = vld [vmem:[#allocation5 + $0x30] sm:$0xff]
    %v104 = vld [vmem:[#allocation5 + $0x38] sm:$0xff]
    %v105 = vld [vmem:[#allocation5 + $0x40] sm:$0xff]
    %v106 = vld [vmem:[#allocation5 + $0x48] sm:$0xff]
    %v107 = vld [vmem:[#allocation5 + $0x50] sm:$0xff]
    %v108 = vld [vmem:[#allocation5 + $0x58] sm:$0xff]
    %v109 = vld [vmem:[#allocation5 + $0x60] sm:$0xff]
    %v110 = vld [vmem:[#allocation5 + $0x68] sm:$0xff]
    %v111 = vld [vmem:[#allocation5 + $0x70] sm:$0xff]
    %v112 = vld [vmem:[#allocation5 + $0x78] sm:$0xff]
    %v113 = vld [vmem:[#allocation5 + $0x80] sm:$0xff]
    %v114 = vld [vmem:[#allocation5 + $0x88] sm:$0xff]
    %v115 = vld [vmem:[#allocation5 + $0x90] sm:$0xff]
    %v116 = vld [vmem:[#allocation5 + $0x98] sm:$0xff]
    %v117 = vld [vmem:[#allocation5 + $0xa0] sm:$0xff]
    %v118 = vld [vmem:[#allocation5 + $0xa8] sm:$0xff]
    %v119 = vld [vmem:[#allocation5 + $0xb0] sm:$0xff]
    %v120 = vld [vmem:[#allocation5 + $0xb8] sm:$0xff]
    %v121 = vld [vmem:[#allocation5 + $0xc0] sm:$0xff]
    %v122 = vld [vmem:[#allocation5 + $0xc8] sm:$0xff]
    %v123 = vld [vmem:[#allocation5 + $0xd0] sm:$0xff]
    %v124 = vld [vmem:[#allocation5 + $0xd8] sm:$0xff]
    %v125 = vld [vmem:[#allocation5 + $0xe0] sm:$0xff]
    %v126 = vld [vmem:[#allocation5 + $0xe8] sm:$0xff]
    %v127 = vld [vmem:[#allocation5 + $0xf0] sm:$0xff]
    %v128 = vld [vmem:[#allocation5 + $0xf8] sm:$0xff]
    %v129 = vld [vmem:[#allocation8] sm:$0xff]
    %v130 = vld [vmem:[#allocation8 + $0x8] sm:$0xff]
    %v131 = vld [vmem:[#allocation8 + $0x10] sm:$0xff]
    %v132 = vld [vmem:[#allocation8 + $0x18] sm:$0xff]
    %v133 = vld [vmem:[#allocation8 + $0x20] sm:$0xff]
    %v134 = vld [vmem:[#allocation8 + $0x28] sm:$0xff]
    %v135 = vld [vmem:[#allocation8 + $0x30] sm:$0xff]
    %v136 = vld [vmem:[#allocation8 + $0x38] sm:$0xff]
    %v137 = vld [vmem:[#allocation8 + $0x40] sm:$0xff]
    %v138 = vld [vmem:[#allocation8 + $0x48] sm:$0xff]
    %v139 = vld [vmem:[#allocation8 + $0x50] sm:$0xff]
    %v140 = vld [vmem:[#allocation8 + $0x58] sm:$0xff]
    %v141 = vld [vmem:[#allocation8 + $0x60] sm:$0xff]
    %v142 = vld [vmem:[#allocation8 + $0x68] sm:$0xff]
    %v143 = vld [vmem:[#allocation8 + $0x70] sm:$0xff]
    %v144 = vld [vmem:[#allocation8 + $0x78] sm:$0xff]
    %v145 = vld [vmem:[#allocation8 + $0x80] sm:$0xff]
    %v146 = vld [vmem:[#allocation8 + $0x88] sm:$0xff]
    %v147 = vld [vmem:[#allocation8 + $0x90] sm:$0xff]
    %v148 = vld [vmem:[#allocation8 + $0x98] sm:$0xff]
    %v149 = vld [vmem:[#allocation8 + $0xa0] sm:$0xff]
    %v150 = vld [vmem:[#allocation8 + $0xa8] sm:$0xff]
    %v151 = vld [vmem:[#allocation8 + $0xb0] sm:$0xff]
    %v152 = vld [vmem:[#allocation8 + $0xb8] sm:$0xff]
    %v153 = vld [vmem:[#allocation8 + $0xc0] sm:$0xff]
    %v154 = vld [vmem:[#allocation8 + $0xc8] sm:$0xff]
    %v155 = vld [vmem:[#allocation8 + $0xd0] sm:$0xff]
    %v156 = vld [vmem:[#allocation8 + $0xd8] sm:$0xff]
    %v157 = vld [vmem:[#allocation8 + $0xe0] sm:$0xff]
    %v158 = vld [vmem:[#allocation8 + $0xe8] sm:$0xff]
    %v159 = vld [vmem:[#allocation8 + $0xf0] sm:$0xff]
    %v160 = vld [vmem:[#allocation8 + $0xf8] sm:$0xff]
    %161 = vmatprep.subr.mxu0 %v130
    %162 = vmatpush1.xpose.msra.mxu0 %v129
    %163 = vmatprep.subr.mxu0 %v132
    %164 = vmatpush1.xpose.msra.mxu0 %v131
    %165 = vmatprep.subr.mxu0 %v134
    %166 = vmatpush1.xpose.msra.mxu0 %v133
    %167 = vmatprep.subr.mxu0 %v136
    %168 = vmatpush1.xpose.msra.mxu0 %v135
    %169 = vmatprep.subr.mxu0 %v138
    %170 = vmatpush1.xpose.msra.mxu0 %v137
    %171 = vmatprep.subr.mxu0 %v140
    %172 = vmatpush1.xpose.msra.mxu0 %v139
    %173 = vmatprep.subr.mxu0 %v142
    %174 = vmatpush1.xpose.msra.mxu0 %v141
    %175 = vmatprep.subr.mxu0 %v144
    %176 = vmatpush1.xpose.msra.mxu0 %v143
    %177 = vmatprep.subr.mxu0 %v146
    %178 = vmatpush1.xpose.msra.mxu0 %v145
    %179 = vmatprep.subr.mxu0 %v148
    %180 = vmatpush1.xpose.msra.mxu0 %v147
    %181 = vmatprep.subr.mxu0 %v150
    %182 = vmatpush1.xpose.msra.mxu0 %v149
    %183 = vmatprep.subr.mxu0 %v152
    %184 = vmatpush1.xpose.msra.mxu0 %v151
    %185 = vmatprep.subr.mxu0 %v154
    %186 = vmatpush1.xpose.msra.mxu0 %v153
    %187 = vmatprep.subr.mxu0 %v156
    %188 = vmatpush1.xpose.msra.mxu0 %v155
    %189 = vmatprep.subr.mxu0 %v158
    %190 = vmatpush1.xpose.msra.mxu0 %v157
    %191 = vmatprep.subr.mxu0 %v160
    %192 = vmatpush1.xpose.msra.mxu0 %v159
    %193 = vmatprep.subr.mxu0 0.0
    %194 = vmatpush1.xpose.msra.mxu0 0.0
    %195 = vmatprep.subr.mxu0 0.0
    %196 = vmatpush1.xpose.msra.mxu0 0.0
    %197 = vmatprep.subr.mxu0 0.0
    %198 = vmatpush1.xpose.msra.mxu0 0.0
    %199 = vmatprep.subr.mxu0 0.0
    %200 = vmatpush1.xpose.msra.mxu0 0.0
    %201 = vmatprep.subr.mxu0 0.0
    %202 = vmatpush1.xpose.msra.mxu0 0.0
    %203 = vmatprep.subr.mxu0 0.0
    %204 = vmatpush1.xpose.msra.mxu0 0.0
    %205 = vmatprep.subr.mxu0 0.0
    %206 = vmatpush1.xpose.msra.mxu0 0.0
    %207 = vmatprep.subr.mxu0 0.0
    %208 = vmatpush1.xpose.msra.mxu0 0.0
    %209 = vmatprep.subr.mxu0 0.0
    %210 = vmatpush1.xpose.msra.mxu0 0.0
    %211 = vmatprep.subr.mxu0 0.0
    %212 = vmatpush1.xpose.msra.mxu0 0.0
    %213 = vmatprep.subr.mxu0 0.0
    %214 = vmatpush1.xpose.msra.mxu0 0.0
    %215 = vmatprep.subr.mxu0 0.0
    %216 = vmatpush1.xpose.msra.mxu0 0.0
    %217 = vmatprep.subr.mxu0 0.0
    %218 = vmatpush1.xpose.msra.mxu0 0.0
    %219 = vmatprep.subr.mxu0 0.0
    %220 = vmatpush1.xpose.msra.mxu0 0.0
    %221 = vmatprep.subr.mxu0 0.0
    %222 = vmatpush1.xpose.msra.mxu0 0.0
    %223 = vmatprep.subr.mxu0 0.0
    %224 = vmatpush1.xpose.msra.mxu0 0.0
    %225 = vmatprep.mubr.f32.mxu0 %v98
    %226 = vmatmul.mubr.f32.gmra.mrb[0].mxu0 %v97
    %v227 = vpop.f32.mrb[0].mxu0
    %v228 = vadd.f32 0.0, %v227
    %v229 = vpop.f32.mrb[0].mxu0
    %230 = vmatprep.mubr.f32.mxu0 %v100
    %231 = vmatmul.mubr.f32.gmra.mrb[0].mxu0 %v99
    %v232 = vpop.f32.mrb[0].mxu0
    %v233 = vadd.f32 0.0, %v232
    %v234 = vpop.f32.mrb[0].mxu0
    %235 = vmatprep.mubr.f32.mxu0 %v102
    %236 = vmatmul.mubr.f32.gmra.mrb[0].mxu0 %v101
    %v237 = vpop.f32.mrb[0].mxu0
    %v238 = vadd.f32 0.0, %v237
    %v239 = vpop.f32.mrb[0].mxu0
    %240 = vmatprep.mubr.f32.mxu0 %v104
    %241 = vmatmul.mubr.f32.gmra.mrb[0].mxu0 %v103
    %v242 = vpop.f32.mrb[0].mxu0
    %v243 = vadd.f32 0.0, %v242
    %v244 = vpop.f32.mrb[0].mxu0
    %245 = vmatprep.mubr.f32.mxu0 %v106
    %246 = vmatmul.mubr.f32.gmra.mrb[0].mxu0 %v105
    %v247 = vpop.f32.mrb[0].mxu0
    %v248 = vadd.f32 0.0, %v247
    %v249 = vpop.f32.mrb[0].mxu0
    %250 = vmatprep.mubr.f32.mxu0 %v108
    %251 = vmatmul.mubr.f32.gmra.mrb[0].mxu0 %v107
    %v252 = vpop.f32.mrb[0].mxu0
    %v253 = vadd.f32 0.0, %v252
    %v254 = vpop.f32.mrb[0].mxu0
    %255 = vmatprep.mubr.f32.mxu0 %v110
    %256 = vmatmul.mubr.f32.gmra.mrb[0].mxu0 %v109
    %v257 = vpop.f32.mrb[0].mxu0
    %v258 = vadd.f32 0.0, %v257
    %v259 = vpop.f32.mrb[0].mxu0
    %260 = vmatprep.mubr.f32.mxu0 %v112
    %261 = vmatmul.mubr.f32.gmra.mrb[0].mxu0 %v111
    %v262 = vpop.f32.mrb[0].mxu0
    %v263 = vadd.f32 0.0, %v262
    %v264 = vpop.f32.mrb[0].mxu0
    %265 = vmatprep.mubr.f32.mxu0 %v114
    %266 = vmatmul.mubr.f32.gmra.mrb[0].mxu0 %v113
    %v267 = vpop.f32.mrb[0].mxu0
    %v268 = vadd.f32 0.0, %v267
    %v269 = vpop.f32.mrb[0].mxu0
    %270 = vmatprep.mubr.f32.mxu0 %v116
    %271 = vmatmul.mubr.f32.gmra.mrb[0].mxu0 %v115
    %v272 = vpop.f32.mrb[0].mxu0
    %v273 = vadd.f32 0.0, %v272
    %v274 = vpop.f32.mrb[0].mxu0
    %275 = vmatprep.mubr.f32.mxu0 %v118
    %276 = vmatmul.mubr.f32.gmra.mrb[0].mxu0 %v117
    %v277 = vpop.f32.mrb[0].mxu0
    %v278 = vadd.f32 0.0, %v277
    %v279 = vpop.f32.mrb[0].mxu0
    %280 = vmatprep.mubr.f32.mxu0 %v120
    %281 = vmatmul.mubr.f32.gmra.mrb[0].mxu0 %v119
    %v282 = vpop.f32.mrb[0].mxu0
    %v283 = vadd.f32 0.0, %v282
    %v284 = vpop.f32.mrb[0].mxu0
    %285 = vmatprep.mubr.f32.mxu0 %v122
    %286 = vmatmul.mubr.f32.gmra.mrb[0].mxu0 %v121
    %v287 = vpop.f32.mrb[0].mxu0
    %v288 = vadd.f32 0.0, %v287
    %v289 = vpop.f32.mrb[0].mxu0
    %290 = vmatprep.mubr.f32.mxu0 %v124
    %291 = vmatmul.mubr.f32.gmra.mrb[0].mxu0 %v123
    %v292 = vpop.f32.mrb[0].mxu0
    %v293 = vadd.f32 0.0, %v292
    %v294 = vpop.f32.mrb[0].mxu0
    %295 = vmatprep.mubr.f32.mxu0 %v126
    %296 = vmatmul.mubr.f32.gmra.mrb[0].mxu0 %v125
    %v297 = vpop.f32.mrb[0].mxu0
    %v298 = vadd.f32 0.0, %v297
    %v299 = vpop.f32.mrb[0].mxu0
    %300 = vmatprep.mubr.f32.mxu0 %v128
    %301 = vmatmul.mubr.f32.gmra.mrb[0].mxu0 %v127
    %v302 = vpop.f32.mrb[0].mxu0
    %v303 = vadd.f32 0.0, %v302
    %v304 = vpop.f32.mrb[0].mxu0
    %305 = vdwg.mxu0
    %v306 = vadd.f32 %v81, %v228
    %v307 = vadd.f32 %v82, %v233
    %v308 = vadd.f32 %v83, %v238
    %v309 = vadd.f32 %v84, %v243
    %v310 = vadd.f32 %v85, %v248
    %v311 = vadd.f32 %v86, %v253
    %v312 = vadd.f32 %v87, %v258
    %v313 = vadd.f32 %v88, %v263
    %v314 = vadd.f32 %v89, %v268
    %v315 = vadd.f32 %v90, %v273
    %v316 = vadd.f32 %v91, %v278
    %v317 = vadd.f32 %v92, %v283
    %v318 = vadd.f32 %v93, %v288
    %v319 = vadd.f32 %v94, %v293
    %v320 = vadd.f32 %v95, %v298
    %v321 = vadd.f32 %v96, %v303
    %322 = vst [vmem:[#allocation10] sm:$0xff] %v306
    %323 = vst [vmem:[#allocation10 + $0x8] sm:$0xff] %v307
    %324 = vst [vmem:[#allocation10 + $0x10] sm:$0xff] %v308
    %325 = vst [vmem:[#allocation10 + $0x18] sm:$0xff] %v309
    %326 = vst [vmem:[#allocation10 + $0x20] sm:$0xff] %v310
    %327 = vst [vmem:[#allocation10 + $0x28] sm:$0xff] %v311
    %328 = vst [vmem:[#allocation10 + $0x30] sm:$0xff] %v312
    %329 = vst [vmem:[#allocation10 + $0x38] sm:$0xff] %v313
    %330 = vst [vmem:[#allocation10 + $0x40] sm:$0xff] %v314
    %331 = vst [vmem:[#allocation10 + $0x48] sm:$0xff] %v315
    %332 = vst [vmem:[#allocation10 + $0x50] sm:$0xff] %v316
    %333 = vst [vmem:[#allocation10 + $0x58] sm:$0xff] %v317
    %334 = vst [vmem:[#allocation10 + $0x60] sm:$0xff] %v318
    %335 = vst [vmem:[#allocation10 + $0x68] sm:$0xff] %v319
    %336 = vst [vmem:[#allocation10 + $0x70] sm:$0xff] %v320
    %337 = vst [vmem:[#allocation10 + $0x78] sm:$0xff] %v321
    // Predicated region
    $region22: #{tpu_custom_call.1} parent=1 // pred_check
      %p338 = pneg %p61
    $region23: #{tpu_custom_call.1} parent=1 // pred_check_branch
      %340 = sbr.rel (%p338) target = $region25
    $region24: #{tpu_custom_call.1} parent=1 // pred_region
      %v341 = vld [vmem:[#allocation10] sm:$0xff]
      %v342 = vld [vmem:[#allocation10 + $0x8] sm:$0xff]
      %v343 = vld [vmem:[#allocation10 + $0x10] sm:$0xff]
      %v344 = vld [vmem:[#allocation10 + $0x18] sm:$0xff]
      %v345 = vld [vmem:[#allocation10 + $0x20] sm:$0xff]
      %v346 = vld [vmem:[#allocation10 + $0x28] sm:$0xff]
      %v347 = vld [vmem:[#allocation10 + $0x30] sm:$0xff]
      %v348 = vld [vmem:[#allocation10 + $0x38] sm:$0xff]
      %v349 = vld [vmem:[#allocation10 + $0x40] sm:$0xff]
      %v350 = vld [vmem:[#allocation10 + $0x48] sm:$0xff]
      %v351 = vld [vmem:[#allocation10 + $0x50] sm:$0xff]
      %v352 = vld [vmem:[#allocation10 + $0x58] sm:$0xff]
      %v353 = vld [vmem:[#allocation10 + $0x60] sm:$0xff]
      %v354 = vld [vmem:[#allocation10 + $0x68] sm:$0xff]
      %v355 = vld [vmem:[#allocation10 + $0x70] sm:$0xff]
      %v356 = vld [vmem:[#allocation10 + $0x78] sm:$0xff]
      %v357 = vadd.f32 %v341, 1.0
      %v358 = vadd.f32 %v342, 1.0
      %v359 = vadd.f32 %v343, 1.0
      %v360 = vadd.f32 %v344, 1.0
      %v361 = vadd.f32 %v345, 1.0
      %v362 = vadd.f32 %v346, 1.0
      %v363 = vadd.f32 %v347, 1.0
      %v364 = vadd.f32 %v348, 1.0
      %v365 = vadd.f32 %v349, 1.0
      %v366 = vadd.f32 %v350, 1.0
      %v367 = vadd.f32 %v351, 1.0
      %v368 = vadd.f32 %v352, 1.0
      %v369 = vadd.f32 %v353, 1.0
      %v370 = vadd.f32 %v354, 1.0
      %v371 = vadd.f32 %v355, 1.0
      %v372 = vadd.f32 %v356, 1.0
      %v373 = vmul.f32 %v357, %v357
      %v374 = vmul.f32 %v358, %v358
      %v375 = vmul.f32 %v359, %v359
      %v376 = vmul.f32 %v360, %v360
      %v377 = vmul.f32 %v361, %v361
      %v378 = vmul.f32 %v362, %v362
      %v379 = vmul.f32 %v363, %v363
      %v380 = vmul.f32 %v364, %v364
      %v381 = vmul.f32 %v365, %v365
      %v382 = vmul.f32 %v366, %v366
      %v383 = vmul.f32 %v367, %v367
      %v384 = vmul.f32 %v368, %v368
      %v385 = vmul.f32 %v369, %v369
      %v386 = vmul.f32 %v370, %v370
      %v387 = vmul.f32 %v371, %v371
      %v388 = vmul.f32 %v372, %v372
      %389 = vst [vmem:[#allocation10] sm:$0xff] %v373
      %390 = vst [vmem:[#allocation10 + $0x8] sm:$0xff] %v374
      %391 = vst [vmem:[#allocation10 + $0x10] sm:$0xff] %v375
      %392 = vst [vmem:[#allocation10 + $0x18] sm:$0xff] %v376
      %393 = vst [vmem:[#allocation10 + $0x20] sm:$0xff] %v377
      %394 = vst [vmem:[#allocation10 + $0x28] sm:$0xff] %v378
      %395 = vst [vmem:[#allocation10 + $0x30] sm:$0xff] %v379
      %396 = vst [vmem:[#allocation10 + $0x38] sm:$0xff] %v380
      %397 = vst [vmem:[#allocation10 + $0x40] sm:$0xff] %v381
      %398 = vst [vmem:[#allocation10 + $0x48] sm:$0xff] %v382
      %399 = vst [vmem:[#allocation10 + $0x50] sm:$0xff] %v383
      %400 = vst [vmem:[#allocation10 + $0x58] sm:$0xff] %v384
      %401 = vst [vmem:[#allocation10 + $0x60] sm:$0xff] %v385
      %402 = vst [vmem:[#allocation10 + $0x68] sm:$0xff] %v386
      %403 = vst [vmem:[#allocation10 + $0x70] sm:$0xff] %v387
      %404 = vst [vmem:[#allocation10 + $0x78] sm:$0xff] %v388
    $region25: #{tpu_custom_call.1} parent=1 // pred_fallthru
      _
    // Predicated region
    $region26: #{tpu_custom_call.1} parent=1 // pred_check
      _
    $region27: #{tpu_custom_call.1} parent=1 // pred_check_branch
      %406 = sbr.rel (0) target = $region29
    $region28: #{tpu_custom_call.1} parent=1 // pred_region
      %s407 = sld [smem:[#allocation3]]
      %s408 = sld [smem:[#allocation4]]
      %s409 = smul.u32 16, %s407
      %s411 = ssub.s32 2048, 2048
      %412 = vsyncadd [#allocation7], %s411
      %s413 = sadd.s32 %s408, %s409
      %s414 = smul.addr %s413, 128
      %s415 = scalar_lea.hbm %s4, %s414
      %s416 = sshll.u32 [#allocation10], 4
      %s417 = int_to_ptr.vmem [resolvable:$true] %s416
      %422 = dma.vmem_to_hbm [thread:$0]  %s417, 2048, %s415, [#allocation7], 128, 128, 8
    $region29: #{tpu_custom_call.1} parent=1 // pred_fallthru
      _
    // Predicated region
    $region30: #{tpu_custom_call.1} parent=1 // pred_check
      _
    $region31: #{tpu_custom_call.1} parent=1 // pred_check_branch
      %424 = sbr.rel (0) target = $region33
    $region32: #{tpu_custom_call.1} parent=1 // pred_region
      %425 = dma.done [#allocation7], 2048
    $region33: #{tpu_custom_call.1} parent=1 // pred_fallthru
      _
    %426 = vsyncpa [#allocation6], 1
    %427 = vsyncpa [#allocation9], 1
    %428 = vsyncpa [#allocation7], 1

</llo_original>
